<compile_context>
chip_gen: v5e
topology: v5e:2x2
jax: 0.10.0
libtpu: 0.0.40
codegen_flags: <defaults>
</compile_context>

<pallas_src>
import jax
import jax.numpy as jnp
from jax.experimental import pallas as pl
from jax.experimental.pallas import tpu as pltpu


def _pick_block_b(B, nh, W, itemsize):
    """Batch elements per grid step.

    VMEM-aware (double-buffered in/out blocks + row-padded scratch stay well under
    v7x's 64 MiB), keeps the per-step matmul M = Bt*nh modest, and prefers >= 4
    grid steps (2 per v7x TensorCore) so each core still overlaps its input DMA
    with compute; falls back to >= 2 steps / the largest divisor otherwise."""
    per_b = (2 * 2 * nh * W + (nh + 2) * W) * itemsize   # dbl-buffered in+out, scratch
    cap_vmem = max(1, (24 << 20) // max(per_b, 1))
    cap_m = max(1, 2048 // max(nh, 1))
    cap = min(cap_vmem, cap_m)
    divisors = [d for d in range(1, B + 1) if B % d == 0 and d <= cap] or [1]
    for min_steps in (4, 2, 1):
        ok = [d for d in divisors if B // d >= min_steps]
        if ok:
            return max(ok)
    return 1


def cpe_forward(x, weight, patch_num, block_b=None):
    """x: [B, N, C] (N = patch_num**2), weight: [C, C, 3, 3] (OIHW, like PyTorch)."""
    B, N, C = x.shape
    nh = nw = patch_num
    assert N == nh * nw, "N must equal patch_num**2"
    assert weight.shape == (C, C, 3, 3)

    W = nw * C                                   # packed lane width of one token row
    assert W % 128 == 0, "packed row width nw*C must be a multiple of 128"
    # TODO(synk): large-C configs (C >= 128, e.g. patch_size=16 -> C=256) should use a
    # per-tap dense [C, C] matmul kernel instead of the block-tridiagonal packed weight.
    assert W <= 1024, "block-tridiagonal packed weight only sensible for small C"

    dtype = x.dtype
    itemsize = jnp.dtype(dtype).itemsize

    Bt = _pick_block_b(B, nh, W, itemsize) if block_b is None else block_b
    assert B % Bt == 0
    grid = (B // Bt,)

    # ---- weight repack (once, in the wrapper) -------------------------------
    # taps[kh, kw, ci, co] = weight[co, ci, kh, kw]
    taps = jnp.transpose(weight, (2, 3, 1, 0)).astype(dtype)
    # Block-tridiagonal per-kh weight: input lane group j' (width position) feeds
    # output lane group j = j' - (kw - 1); out-of-range groups get no block, which
    # implements the conv's zero padding along the width axis for free.
    wk = jnp.stack([
        sum(jnp.kron(jnp.eye(nw, k=1 - kw, dtype=dtype), taps[kh, kw])
            for kw in range(3))
        for kh in range(3)
    ])                                           # [3, W, W]

    xr = x.reshape(B, nh, W)                     # free contiguous reshape (lane-dense)

    def kernel(x_ref, w_ref, o_ref, xpad_ref):
        # x_ref   : [Bt, nh, W]     lane-dense token rows (conv input + residual)
        # w_ref   : [3, W, W]       block-tridiagonal per-kh weights
        # o_ref   : [Bt, nh, W]
        # xpad_ref: [Bt, nh+2, W]   VMEM scratch, row-padded copy of the block
        xv = x_ref[...]

        # Zero ONLY the 2 halo rows; the interior is fully overwritten every step.
        zrow = jnp.zeros((Bt, 1, W), xv.dtype)
        xpad_ref[:, 0:1, :] = zrow
        xpad_ref[:, nh + 1:nh + 2, :] = zrow
        xpad_ref[:, 1:nh + 1, :] = xv

        acc = xv.reshape(Bt * nh, W).astype(jnp.float32)          # residual in f32
        for kh in range(3):                                       # static unroll
            # Cheap static ref-slice per vertical tap (no big padded value load).
            slab = xpad_ref[:, kh:kh + nh, :].reshape(Bt * nh, W)
            acc = acc + jnp.dot(slab, w_ref[kh],
                                preferred_element_type=jnp.float32)
        o_ref[...] = acc.reshape(Bt, nh, W).astype(o_ref.dtype)

    # Explicit VMEM budget: double-buffered in/out blocks + weight + scratch, slack.
    est = (2 * 2 * Bt * nh * W + 2 * 3 * W * W + Bt * (nh + 2) * W) * itemsize
    vmem_limit = int(min(max(2 * est, 32 << 20), 56 << 20))

    out = pl.pallas_call(
        kernel,
        out_shape=jax.ShapeDtypeStruct((B, nh, W), dtype),
        grid_spec=pltpu.PrefetchScalarGridSpec(
            num_scalar_prefetch=0,
            grid=grid,
            in_specs=[
                pl.BlockSpec((Bt, nh, W), lambda b: (b, 0, 0)),
                pl.BlockSpec((3, W, W), lambda b: (0, 0, 0)),
            ],
            out_specs=pl.BlockSpec((Bt, nh, W), lambda b: (b, 0, 0)),
            scratch_shapes=[pltpu.VMEM((Bt, nh + 2, W), dtype)],
        ),
        compiler_params=pltpu.CompilerParams(
            dimension_semantics=("parallel",),
            vmem_limit_bytes=vmem_limit),
    )(xr, wk)

    return out.reshape(B, N, C)


def cpe_reference(x, weight, patch_num):
    """Plain-JAX reference matching the PyTorch module exactly."""
    B, N, C = x.shape
    nh = nw = patch_num
    xs = x.reshape(B, nh, nw, C).transpose(0, 3, 1, 2)              # NCHW
    conv = jax.lax.conv_general_dilated(
        xs, weight,
        window_strides=(1, 1),
        padding=((1, 1), (1, 1)),
        dimension_numbers=("NCHW", "OIHW", "NCHW"),
    )
    conv = conv.transpose(0, 2, 3, 1).reshape(B, N, C)              # b (nh nw) chw
    return x + conv


if __name__ == "__main__":
    # Small, module-consistent shapes: patch_num=8 -> N=64 tokens,
    # patch_size=4 -> C=16 channels (nw*C = 128 lanes), batch B=2.
    B, patch_num, patch_size = 2, 8, 4
    C = patch_size ** 2
    N = patch_num ** 2

    key = jax.random.PRNGKey(0)
    kx, kw_ = jax.random.split(key)
    x = jax.random.normal(kx, (B, N, C), dtype=jnp.float32)
    weight = jax.random.normal(kw_, (C, C, 3, 3), dtype=jnp.float32) * 0.05

    out = jax.block_until_ready(cpe_forward(x, weight, patch_num))
    ref = cpe_reference(x, weight, patch_num)

    assert out.shape == (B, N, C)
    assert jnp.allclose(out, ref, atol=1e-4, rtol=1e-4), "mismatch vs reference conv"
    print("KERNEL_OK")
</pallas_src>

<mosaic_0001>
module attributes {stable_mosaic.version = 11 : i64} {
  func.func @kernel(%arg0: i32, %arg1: memref<1x8x128xf32, #tpu.memory_space<vmem>>, %arg2: memref<3x128x128xf32, #tpu.memory_space<vmem>>, %arg3: memref<1x8x128xf32, #tpu.memory_space<vmem>>, %arg4: memref<1x10x128xf32, #tpu.memory_space<vmem>>) attributes {dimension_semantics = [#tpu.dimension_semantics<parallel>], iteration_bounds = array<i64: 2>, scalar_prefetch = 0 : i64, scratch_operands = 1 : i64, tpu.core_type = #tpu.core_type<tc>, window_params = [{transform_indices = @transform_0, window_bounds = array<i64: 1, 8, 128>}, {pipeline_mode = #tpu.pipeline_mode<synchronous>, transform_indices = @transform_1, window_bounds = array<i64: 3, 128, 128>}, {transform_indices = @transform_2, window_bounds = array<i64: 1, 8, 128>}]} {
    %c0 = arith.constant 0 : index
    %c0_0 = arith.constant 0 : index
    %c0_1 = arith.constant 0 : index
    %0 = vector.load %arg1[%c0, %c0_0, %c0_1] : memref<1x8x128xf32, #tpu.memory_space<vmem>>, vector<1x8x128xf32>
    %cst = arith.constant 0.000000e+00 : f32
    %1 = vector.broadcast %cst : f32 to vector<1x1x128xf32>
    %c0_2 = arith.constant 0 : index
    %c0_3 = arith.constant 0 : index
    %c0_4 = arith.constant 0 : index
    %2 = vector.load %arg4[%c0_2, %c0_3, %c0_4] : memref<1x10x128xf32, #tpu.memory_space<vmem>>, vector<1x1x128xf32>
    tpu.vector_store %arg4[%c0_2, %c0_3, %c0_4], %1 {strides = array<i32>} : memref<1x10x128xf32, #tpu.memory_space<vmem>>, vector<1x1x128xf32>,
    %c0_5 = arith.constant 0 : index
    %c9 = arith.constant 9 : index
    %c0_6 = arith.constant 0 : index
    %3 = vector.load %arg4[%c0_5, %c9, %c0_6] : memref<1x10x128xf32, #tpu.memory_space<vmem>>, vector<1x1x128xf32>
    tpu.vector_store %arg4[%c0_5, %c9, %c0_6], %1 {strides = array<i32>} : memref<1x10x128xf32, #tpu.memory_space<vmem>>, vector<1x1x128xf32>,
    %c0_7 = arith.constant 0 : index
    %c1 = arith.constant 1 : index
    %c0_8 = arith.constant 0 : index
    %4 = vector.load %arg4[%c0_7, %c1, %c0_8] : memref<1x10x128xf32, #tpu.memory_space<vmem>>, vector<1x8x128xf32>
    tpu.vector_store %arg4[%c0_7, %c1, %c0_8], %0 {strides = array<i32>} : memref<1x10x128xf32, #tpu.memory_space<vmem>>, vector<1x8x128xf32>,
    %5 = vector.shape_cast %0 : vector<1x8x128xf32> to vector<8x128xf32>
    %c0_9 = arith.constant 0 : index
    %c0_10 = arith.constant 0 : index
    %c0_11 = arith.constant 0 : index
    %6 = vector.load %arg4[%c0_9, %c0_10, %c0_11] : memref<1x10x128xf32, #tpu.memory_space<vmem>>, vector<1x8x128xf32>
    %7 = vector.shape_cast %6 : vector<1x8x128xf32> to vector<8x128xf32>
    %c0_12 = arith.constant 0 : index
    %c0_13 = arith.constant 0 : index
    %c0_14 = arith.constant 0 : index
    %8 = vector.load %arg2[%c0_12, %c0_13, %c0_14] : memref<3x128x128xf32, #tpu.memory_space<vmem>>, vector<1x128x128xf32>
    %9 = vector.shape_cast %8 : vector<1x128x128xf32> to vector<128x128xf32>
    %cst_15 = arith.constant dense<0.000000e+00> : vector<8x128xf32>
    %10 = tpu.matmul %7, %9, %cst_15 {dimension_numbers = #tpu.dot_dimension_numbers<[1], [0], [0], [1], [0, 0, 1, 1], [], []>} : vector<8x128xf32>, vector<128x128xf32>, vector<8x128xf32> -> vector<8x128xf32>
    %11 = arith.addf %5, %10 : vector<8x128xf32>
    %c0_16 = arith.constant 0 : index
    %c1_17 = arith.constant 1 : index
    %c0_18 = arith.constant 0 : index
    %12 = vector.load %arg4[%c0_16, %c1_17, %c0_18] : memref<1x10x128xf32, #tpu.memory_space<vmem>>, vector<1x8x128xf32>
    %13 = vector.shape_cast %12 : vector<1x8x128xf32> to vector<8x128xf32>
    %c1_19 = arith.constant 1 : index
    %c0_20 = arith.constant 0 : index
    %c0_21 = arith.constant 0 : index
    %14 = vector.load %arg2[%c1_19, %c0_20, %c0_21] : memref<3x128x128xf32, #tpu.memory_space<vmem>>, vector<1x128x128xf32>
    %15 = vector.shape_cast %14 : vector<1x128x128xf32> to vector<128x128xf32>
    %cst_22 = arith.constant dense<0.000000e+00> : vector<8x128xf32>
    %16 = tpu.matmul %13, %15, %cst_22 {dimension_numbers = #tpu.dot_dimension_numbers<[1], [0], [0], [1], [0, 0, 1, 1], [], []>} : vector<8x128xf32>, vector<128x128xf32>, vector<8x128xf32> -> vector<8x128xf32>
    %17 = arith.addf %11, %16 : vector<8x128xf32>
    %c0_23 = arith.constant 0 : index
    %c2 = arith.constant 2 : index
    %c0_24 = arith.constant 0 : index
    %18 = vector.load %arg4[%c0_23, %c2, %c0_24] : memref<1x10x128xf32, #tpu.memory_space<vmem>>, vector<1x8x128xf32>
    %19 = vector.shape_cast %18 : vector<1x8x128xf32> to vector<8x128xf32>
    %c2_25 = arith.constant 2 : index
    %c0_26 = arith.constant 0 : index
    %c0_27 = arith.constant 0 : index
    %20 = vector.load %arg2[%c2_25, %c0_26, %c0_27] : memref<3x128x128xf32, #tpu.memory_space<vmem>>, vector<1x128x128xf32>
    %21 = vector.shape_cast %20 : vector<1x128x128xf32> to vector<128x128xf32>
    %cst_28 = arith.constant dense<0.000000e+00> : vector<8x128xf32>
    %22 = tpu.matmul %19, %21, %cst_28 {dimension_numbers = #tpu.dot_dimension_numbers<[1], [0], [0], [1], [0, 0, 1, 1], [], []>} : vector<8x128xf32>, vector<128x128xf32>, vector<8x128xf32> -> vector<8x128xf32>
    %23 = arith.addf %17, %22 : vector<8x128xf32>
    %24 = vector.shape_cast %23 : vector<8x128xf32> to vector<1x8x128xf32>
    %c0_29 = arith.constant 0 : index
    %c0_30 = arith.constant 0 : index
    %c0_31 = arith.constant 0 : index
    %25 = vector.load %arg3[%c0_29, %c0_30, %c0_31] : memref<1x8x128xf32, #tpu.memory_space<vmem>>, vector<1x8x128xf32>
    tpu.vector_store %arg3[%c0_29, %c0_30, %c0_31], %24 {strides = array<i32>} : memref<1x8x128xf32, #tpu.memory_space<vmem>>, vector<1x8x128xf32>,
    return
  }
  func.func @transform_0(%arg0: i32) -> (i32, i32, i32) {
    %c0_i32 = arith.constant 0 : i32
    %c0_i32_0 = arith.constant 0 : i32
    %c0_i32_1 = arith.constant 0 : i32
    return %arg0, %c0_i32, %c0_i32_0 : i32, i32, i32
  }
  func.func @transform_1(%arg0: i32) -> (i32, i32, i32) {
    %c0_i32 = arith.constant 0 : i32
    %c0_i32_0 = arith.constant 0 : i32
    %c0_i32_1 = arith.constant 0 : i32
    %c0_i32_2 = arith.constant 0 : i32
    return %c0_i32, %c0_i32_0, %c0_i32_1 : i32, i32, i32
  }
  func.func @transform_2(%arg0: i32) -> (i32, i32, i32) {
    %c0_i32 = arith.constant 0 : i32
    %c0_i32_0 = arith.constant 0 : i32
    %c0_i32_1 = arith.constant 0 : i32
    return %arg0, %c0_i32, %c0_i32_0 : i32, i32, i32
  }
}

</mosaic_0001>

<llo_original>
// kernel: tpu_custom_call.1
$region0: #{tpu_custom_call.1}
  #allocation0 [shape = 'u32[]', space=smem, size = 0x4, offset = 0x4, fixed_abs, tag = 'smem constant byte address 0x4 - core index']
  #allocation1 [shape = 'u32[72,128]{1,0:T(1,128)}', space=vmem, size = 0x9000, scoped, tag = 'internal scratch']
  #allocation2 [shape = 'f32[1,10,128]{2,1,0:T(8,128)}', space=vmem, size = 0x2000, scoped, tag = 'scratch operand']
  %s0 = inlined_call_operand.hbm [shape: f32[2,8,128], index: 0, kind: input, shape index: {}]
  %s1 = inlined_call_operand.hbm [shape: f32[3,128,128], index: 1, kind: input, shape index: {}]
  %s2 = inlined_call_operand.hbm [shape: f32[2,8,128], index: 2, kind: output, shape index: {}]
  %s3 = sld [smem:[#allocation0]]
  $region49: #{tpu_custom_call.1} parent=0
    _
  %s5 = ssub.s32 1, %s3
  %s6 = scalar_select 0, %s5, %s3
  $region1: #{tpu_custom_call.1} parent=0
    #allocation3 [shape = 'u8[8192]{0}', space=vmem, size = 0x2000, scoped, tag = 'input window, operand 0']
    #allocation4 [shape = 's32[2]{0}', space=sflag, size = 0x8, scoped, tag = 'scoped memory for tpu_custom_call.1']
    #allocation5 [shape = 's32[2]{0}', space=sflag, size = 0x8, scoped, tag = 'scoped memory for tpu_custom_call.1']
    #allocation6 [shape = 'u8[196608]{0}', space=vmem, size = 0x30000, scoped, tag = 'input window, operand 1, single buffered']
    #allocation7 [shape = 's32[1]{0}', space=sflag, size = 0x4, scoped, tag = 'scoped memory for tpu_custom_call.1']
    #allocation8 [shape = 'u8[8192]{0}', space=vmem, size = 0x2000, scoped, tag = 'output window, operand 0']
    %7 = vsyncpa [#allocation4], 0
    %s8 = scalar_lea.sflag [#allocation4], 1
    %9 = vsyncpa %s8, 0
    %10 = vsyncpa [#allocation7], 0
    %11 = vsyncpa [#allocation5], 0
    %s12 = scalar_lea.sflag [#allocation5], 1
    %13 = vsyncpa %s12, 0
    loop: start=0, step=1, limit=4
    $region2: #{tpu_custom_call.1} parent=1 // loop_pre_header
      _
    $region3: #{tpu_custom_call.1} parent=1 // loop_header
      %s15 = sphi 0, %s19
      %p16 = scmp.ge.s32.totalorder %s15, 4
      %s25 = sphi 0, %s27
      %s28 = sphi 0, %s25
      %s29 = sphi 0, %s28
      %s45 = sphi 0, %s29
      %s49 = sphi 0, %s49
      %s51 = sphi 0, %s49
      %s52 = sphi 0, %s51
      %s66 = sphi 0, %s52
      %s72 = sphi 0, %s74
      %s75 = sphi 0, %s72
      %s76 = sphi 0, %s75
      %s92 = sphi 0, %s76
    $region4: #{tpu_custom_call.1} parent=1 // loop_header_branch
      %18 = sbr.rel (%p16) target = $region8
    $region5: #{tpu_custom_call.1} parent=1 // loop_body
      %s20 = ssub.s32 %s15, 1
      %s21 = ssub.s32 %s15, 2
      %s22 = sadd.s32 %s15, 1
      %s23 = ssub.s32 %s15, %s22
      %p24 = scmp.eq.s32.totalorder %s23, 0
      %s26 = sadd.s32 %s25, 1
      %s27 = scalar_select %p24, %s25, %s26
      %p30 = pneg %p24
      %p31 = scmp.eq.s32.totalorder %s15, 1
      %p32 = por %p30, %p31
      %p33 = scmp.ne.s32.totalorder %s25, %s28
      %p34 = scmp.eq.s32.totalorder %s15, 0
      %p35 = por %p33, %p34
      %p36 = scmp.ne.s32.totalorder %s25, %s28
      %p37 = scmp.eq.s32.totalorder %s20, 1
      %p38 = por %p36, %p37
      %p39 = scmp.ne.s32.totalorder %s28, %s29
      %p40 = scmp.eq.s32.totalorder %s20, 0
      %p41 = por %p39, %p40
      %p42 = scmp.ne.s32.totalorder %s28, %s29
      %p43 = scmp.eq.s32.totalorder %s21, 1
      %p44 = por %p42, %p43
      %p46 = scmp.ne.s32.totalorder %s29, %s45
      %p47 = scmp.eq.s32.totalorder %s21, 0
      %p48 = por %p46, %p47
      %s50 = sadd.s32 %s49, 1
      %p53 = scmp.eq.s32.totalorder %s15, 1
      %p54 = scmp.ne.s32.totalorder %s49, %s51
      %p55 = scmp.eq.s32.totalorder %s15, 0
      %p56 = por %p54, %p55
      %p57 = scmp.ne.s32.totalorder %s49, %s51
      %p58 = scmp.eq.s32.totalorder %s20, 1
      %p59 = por %p57, %p58
      %p60 = scmp.ne.s32.totalorder %s51, %s52
      %p61 = scmp.eq.s32.totalorder %s20, 0
      %p62 = por %p60, %p61
      %p63 = scmp.ne.s32.totalorder %s51, %s52
      %p64 = scmp.eq.s32.totalorder %s21, 1
      %p65 = por %p63, %p64
      %p67 = scmp.ne.s32.totalorder %s52, %s66
      %p68 = scmp.eq.s32.totalorder %s21, 0
      %p69 = por %p67, %p68
      %s70 = ssub.s32 %s15, %s22
      %p71 = scmp.eq.s32.totalorder %s70, 0
      %s73 = sadd.s32 %s72, 1
      %s74 = scalar_select %p71, %s72, %s73
      %p77 = pneg %p71
      %p78 = scmp.eq.s32.totalorder %s15, 1
      %p79 = por %p77, %p78
      %p80 = scmp.ne.s32.totalorder %s72, %s75
      %p81 = scmp.eq.s32.totalorder %s15, 0
      %p82 = por %p80, %p81
      %p83 = scmp.ne.s32.totalorder %s72, %s75
      %p84 = scmp.eq.s32.totalorder %s20, 1
      %p85 = por %p83, %p84
      %p86 = scmp.ne.s32.totalorder %s75, %s76
      %p87 = scmp.eq.s32.totalorder %s20, 0
      %p88 = por %p86, %p87
      %p89 = scmp.ne.s32.totalorder %s75, %s76
      %p90 = scmp.eq.s32.totalorder %s21, 1
      %p91 = por %p89, %p90
      %p93 = scmp.ne.s32.totalorder %s76, %s92
      %p94 = scmp.eq.s32.totalorder %s21, 0
      %p95 = por %p93, %p94
      %p96 = scmp.le.s32.totalorder 1, %s15
      %p97 = scmp.lt.s32.totalorder %s15, 3
      %p98 = pnand %p96, %p97
      %p99 = pneg %p98
      // Predicated region
      $region9: #{tpu_custom_call.1} parent=5 // pred_check
        _
      $region10: #{tpu_custom_call.1} parent=5 // pred_check_branch
        %101 = sbr.rel (%p98) target = $region12
      $region11: #{tpu_custom_call.1} parent=5 // pred_region
        %s102 = ssub.s32 %s15, 1
        // Predicated region
        $region13: #{tpu_custom_call.1} parent=11 // pred_check
          %p103 = pneg %p62
        $region14: #{tpu_custom_call.1} parent=11 // pred_check_branch
          %105 = sbr.rel (%p103) target = $region16
        $region15: #{tpu_custom_call.1} parent=11 // pred_region
          %107 = vsyncadd [#allocation7], 0
          %s108 = sshll.u32 %s1, 4
          %s109 = int_to_ptr.hbm [resolvable:$true] %s108
          %s110 = sshll.u32 [#allocation6], 4
          %s111 = int_to_ptr.vmem [resolvable:$true] %s110
          %116 = dma.hbm_to_vmem [thread:$0]  %s109, 6144, %s111, [#allocation7], 128, 128, 8
        $region16: #{tpu_custom_call.1} parent=11 // pred_fallthru
          _
      $region12: #{tpu_custom_call.1} parent=5 // pred_fallthru
        _
      %p117 = scmp.lt.s32.totalorder %s15, 2
      // Predicated region
      $region17: #{tpu_custom_call.1} parent=5 // pred_check
        %p118 = pneg %p117
      $region18: #{tpu_custom_call.1} parent=5 // pred_check_branch
        %120 = sbr.rel (%p118) target = $region20
      $region19: #{tpu_custom_call.1} parent=5 // pred_region
        // Predicated region
        $region21: #{tpu_custom_call.1} parent=19 // pred_check
          %p121 = pneg %p35
        $region22: #{tpu_custom_call.1} parent=19 // pred_check_branch
          %123 = sbr.rel (%p121) target = $region24
        $region23: #{tpu_custom_call.1} parent=19 // pred_region
          %s124 = sand.u32 %s25, 1
          %s125 = scalar_lea.sflag [#allocation4], %s124
          %s126 = sand.u32 %s25, 1
          %s127 = smul.addr %s126, 8
          %s128 = scalar_lea.vmem [#allocation3], %s127
          %130 = vsyncadd %s125, 0
          %s131 = smul.addr %s15, 8
          %s132 = scalar_lea.hbm %s0, %s131
          %s134 = sshll.u32 %s132, 4
          %s135 = int_to_ptr.hbm [resolvable:$true] %s134
          %s136 = sshll.u32 %s128, 4
          %s137 = int_to_ptr.vmem [resolvable:$true] %s136
          %139 = dma.hbm_to_vmem [thread:$0]  %s135, 128, %s137, %s125
        $region24: #{tpu_custom_call.1} parent=19 // pred_fallthru
          _
      $region20: #{tpu_custom_call.1} parent=5 // pred_fallthru
        _
      %p140 = scmp.le.s32.totalorder 1, %s15
      %p141 = scmp.lt.s32.totalorder %s15, 3
      %p142 = pnand %p140, %p141
      %p143 = pneg %p142
      // Predicated region
      $region25: #{tpu_custom_call.1} parent=5 // pred_check
        _
      $region26: #{tpu_custom_call.1} parent=5 // pred_check_branch
        %145 = sbr.rel (%p142) target = $region28
      $region27: #{tpu_custom_call.1} parent=5 // pred_region
        %s146 = ssub.s32 %s15, 1
        %s147 = sand.u32 %s28, 1
        %s148 = scalar_lea.sflag [#allocation4], %s147
        %s149 = sand.u32 %s28, 1
        %s150 = smul.addr %s149, 8
        %s151 = scalar_lea.vmem [#allocation3], %s150
        // Predicated region
        $region29: #{tpu_custom_call.1} parent=27 // pred_check
          %p152 = pneg %p41
        $region30: #{tpu_custom_call.1} parent=27 // pred_check_branch
          %154 = sbr.rel (%p152) target = $region32
        $region31: #{tpu_custom_call.1} parent=27 // pred_region
          %156 = dma.done %s148, 128
        $region32: #{tpu_custom_call.1} parent=27 // pred_fallthru
          _
        // Predicated region
        $region33: #{tpu_custom_call.1} parent=27 // pred_check
          %p157 = pneg %p62
        $region34: #{tpu_custom_call.1} parent=27 // pred_check_branch
          %159 = sbr.rel (%p157) target = $region36
        $region35: #{tpu_custom_call.1} parent=27 // pred_region
          %161 = dma.done [#allocation7], 6144
        $region36: #{tpu_custom_call.1} parent=27 // pred_fallthru
          _
        %s162 = sand.u32 %s28, 1
        %s163 = scalar_lea.sflag [#allocation4], %s162
        %s164 = sand.u32 %s28, 1
        %s165 = smul.addr %s164, 8
        %s166 = scalar_lea.vmem [#allocation3], %s165
        %p167 = pneg %p41
        %p168 = pneg %p38
        %p169 = pneg %p62
        %p170 = pneg %p59
        %p171 = pneg %p88
        %p172 = pneg %p85
        %s173 = sand.u32 %s75, 1
        %s174 = scalar_lea.sflag [#allocation5], %s173
        %s175 = sand.u32 %s75, 1
        %s176 = smul.addr %s175, 8
        %s177 = scalar_lea.vmem [#allocation8], %s176
        %v178 = vld [vmem:[%s151] sm:$0xff]
        %179 = vst [vmem:[#allocation2] sm:$0x1] 0.0
        %180 = vst [vmem:[#allocation2 + $0x9] sm:$0x1] 0.0
        %181 = vst [vmem:[#allocation2 + $0x1] sm:$0xff] %v178
        %v182 = vld [vmem:[#allocation2] sm:$0xff]
        %v183 = vld [vmem:[#allocation6] sm:$0xff]
        %v184 = vld [vmem:[#allocation6 + $0x8] sm:$0xff]
        %v185 = vld [vmem:[#allocation6 + $0x10] sm:$0xff]
        %v186 = vld [vmem:[#allocation6 + $0x18] sm:$0xff]
        %v187 = vld [vmem:[#allocation6 + $0x20] sm:$0xff]
        %v188 = vld [vmem:[#allocation6 + $0x28] sm:$0xff]
        %v189 = vld [vmem:[#allocation6 + $0x30] sm:$0xff]
        %v190 = vld [vmem:[#allocation6 + $0x38] sm:$0xff]
        %v191 = vld [vmem:[#allocation6 + $0x40] sm:$0xff]
        %v192 = vld [vmem:[#allocation6 + $0x48] sm:$0xff]
        %v193 = vld [vmem:[#allocation6 + $0x50] sm:$0xff]
        %v194 = vld [vmem:[#allocation6 + $0x58] sm:$0xff]
        %v195 = vld [vmem:[#allocation6 + $0x60] sm:$0xff]
        %v196 = vld [vmem:[#allocation6 + $0x68] sm:$0xff]
        %v197 = vld [vmem:[#allocation6 + $0x70] sm:$0xff]
        %v198 = vld [vmem:[#allocation6 + $0x78] sm:$0xff]
        %199 = vmatpush.msra.mxu0 %v198
        %200 = vmatpush.msra.mxu0 %v197
        %201 = vmatpush.msra.mxu0 %v196
        %202 = vmatpush.msra.mxu0 %v195
        %203 = vmatpush.msra.mxu0 %v194
        %204 = vmatpush.msra.mxu0 %v193
        %205 = vmatpush.msra.mxu0 %v192
        %206 = vmatpush.msra.mxu0 %v191
        %207 = vmatpush.msra.mxu0 %v190
        %208 = vmatpush.msra.mxu0 %v189
        %209 = vmatpush.msra.mxu0 %v188
        %210 = vmatpush.msra.mxu0 %v187
        %211 = vmatpush.msra.mxu0 %v186
        %212 = vmatpush.msra.mxu0 %v185
        %213 = vmatpush.msra.mxu0 %v184
        %214 = vmatpush.msra.mxu0 %v183
        %215 = vmatmul.f32.gmra.mxu0 %v182
        %v216 = vpop.f32.mrf.mxu0
        %v217 = vadd.f32 0.0, %v216
        %218 = vdwg.mxu0
        %v219 = vadd.f32 %v178, %v217
        %v220 = vld [vmem:[#allocation2 + $0x1] sm:$0xff]
        %s221 = scalar_lea.vmem [#allocation6], 128
        %v222 = vld [vmem:[%s221] sm:$0xff]
        %v223 = vld [vmem:[%s221 + $0x8] sm:$0xff]
        %v224 = vld [vmem:[%s221 + $0x10] sm:$0xff]
        %v225 = vld [vmem:[%s221 + $0x18] sm:$0xff]
        %v226 = vld [vmem:[%s221 + $0x20] sm:$0xff]
        %v227 = vld [vmem:[%s221 + $0x28] sm:$0xff]
        %v228 = vld [vmem:[%s221 + $0x30] sm:$0xff]
        %v229 = vld [vmem:[%s221 + $0x38] sm:$0xff]
        %v230 = vld [vmem:[%s221 + $0x40] sm:$0xff]
        %v231 = vld [vmem:[%s221 + $0x48] sm:$0xff]
        %v232 = vld [vmem:[%s221 + $0x50] sm:$0xff]
        %v233 = vld [vmem:[%s221 + $0x58] sm:$0xff]
        %v234 = vld [vmem:[%s221 + $0x60] sm:$0xff]
        %v235 = vld [vmem:[%s221 + $0x68] sm:$0xff]
        %v236 = vld [vmem:[%s221 + $0x70] sm:$0xff]
        %v237 = vld [vmem:[%s221 + $0x78] sm:$0xff]
        %238 = vmatpush.msra.mxu0 %v237
        %239 = vmatpush.msra.mxu0 %v236
        %240 = vmatpush.msra.mxu0 %v235
        %241 = vmatpush.msra.mxu0 %v234
        %242 = vmatpush.msra.mxu0 %v233
        %243 = vmatpush.msra.mxu0 %v232
        %244 = vmatpush.msra.mxu0 %v231
        %245 = vmatpush.msra.mxu0 %v230
        %246 = vmatpush.msra.mxu0 %v229
        %247 = vmatpush.msra.mxu0 %v228
        %248 = vmatpush.msra.mxu0 %v227
        %249 = vmatpush.msra.mxu0 %v226
        %250 = vmatpush.msra.mxu0 %v225
        %251 = vmatpush.msra.mxu0 %v224
        %252 = vmatpush.msra.mxu0 %v223
        %253 = vmatpush.msra.mxu0 %v222
        %254 = vmatmul.f32.gmra.mxu0 %v220
        %v255 = vpop.f32.mrf.mxu0
        %v256 = vadd.f32 0.0, %v255
        %257 = vdwg.mxu0
        %v258 = vadd.f32 %v219, %v256
        %v259 = vld [vmem:[#allocation2 + $0x2] sm:$0xff]
        %s260 = scalar_lea.vmem [#allocation6], 256
        %v261 = vld [vmem:[%s260] sm:$0xff]
        %v262 = vld [vmem:[%s260 + $0x8] sm:$0xff]
        %v263 = vld [vmem:[%s260 + $0x10] sm:$0xff]
        %v264 = vld [vmem:[%s260 + $0x18] sm:$0xff]
        %v265 = vld [vmem:[%s260 + $0x20] sm:$0xff]
        %v266 = vld [vmem:[%s260 + $0x28] sm:$0xff]
        %v267 = vld [vmem:[%s260 + $0x30] sm:$0xff]
        %v268 = vld [vmem:[%s260 + $0x38] sm:$0xff]
        %v269 = vld [vmem:[%s260 + $0x40] sm:$0xff]
        %v270 = vld [vmem:[%s260 + $0x48] sm:$0xff]
        %v271 = vld [vmem:[%s260 + $0x50] sm:$0xff]
        %v272 = vld [vmem:[%s260 + $0x58] sm:$0xff]
        %v273 = vld [vmem:[%s260 + $0x60] sm:$0xff]
        %v274 = vld [vmem:[%s260 + $0x68] sm:$0xff]
        %v275 = vld [vmem:[%s260 + $0x70] sm:$0xff]
        %v276 = vld [vmem:[%s260 + $0x78] sm:$0xff]
        %277 = vmatpush.msra.mxu0 %v276
        %278 = vmatpush.msra.mxu0 %v275
        %279 = vmatpush.msra.mxu0 %v274
        %280 = vmatpush.msra.mxu0 %v273
        %281 = vmatpush.msra.mxu0 %v272
        %282 = vmatpush.msra.mxu0 %v271
        %283 = vmatpush.msra.mxu0 %v270
        %284 = vmatpush.msra.mxu0 %v269
        %285 = vmatpush.msra.mxu0 %v268
        %286 = vmatpush.msra.mxu0 %v267
        %287 = vmatpush.msra.mxu0 %v266
        %288 = vmatpush.msra.mxu0 %v265
        %289 = vmatpush.msra.mxu0 %v264
        %290 = vmatpush.msra.mxu0 %v263
        %291 = vmatpush.msra.mxu0 %v262
        %292 = vmatpush.msra.mxu0 %v261
        %293 = vmatmul.f32.gmra.mxu0 %v259
        %v294 = vpop.f32.mrf.mxu0
        %v295 = vadd.f32 0.0, %v294
        %296 = vdwg.mxu0
        %v297 = vadd.f32 %v258, %v295
        %298 = vst [vmem:[%s177] sm:$0xff] %v297
        %s299 = sand.u32 %s75, 1
        %s300 = scalar_lea.sflag [#allocation5], %s299
        %s301 = sand.u32 %s75, 1
        %s302 = smul.addr %s301, 8
        %s303 = scalar_lea.vmem [#allocation8], %s302
        // Predicated region
        $region37: #{tpu_custom_call.1} parent=27 // pred_check
          %p304 = pneg %p85
        $region38: #{tpu_custom_call.1} parent=27 // pred_check_branch
          %306 = sbr.rel (%p304) target = $region40
        $region39: #{tpu_custom_call.1} parent=27 // pred_region
          %308 = vsyncadd %s300, 0
          %s309 = smul.addr %s20, 8
          %s310 = scalar_lea.hbm %s2, %s309
          %s312 = sshll.u32 %s303, 4
          %s313 = int_to_ptr.vmem [resolvable:$true] %s312
          %s314 = sshll.u32 %s310, 4
          %s315 = int_to_ptr.hbm [resolvable:$true] %s314
          %317 = dma.vmem_to_hbm [thread:$0]  %s313, 128, %s315, %s300
        $region40: #{tpu_custom_call.1} parent=27 // pred_fallthru
          _
      $region28: #{tpu_custom_call.1} parent=5 // pred_fallthru
        _
      %p318 = scmp.le.s32.totalorder 2, %s15
      // Predicated region
      $region41: #{tpu_custom_call.1} parent=5 // pred_check
        %p319 = pneg %p318
      $region42: #{tpu_custom_call.1} parent=5 // pred_check_branch
        %321 = sbr.rel (%p319) target = $region44
      $region43: #{tpu_custom_call.1} parent=5 // pred_region
        %s322 = ssub.s32 %s15, 2
        // Predicated region
        $region45: #{tpu_custom_call.1} parent=43 // pred_check
          %p323 = pneg %p91
        $region46: #{tpu_custom_call.1} parent=43 // pred_check_branch
          %325 = sbr.rel (%p323) target = $region48
        $region47: #{tpu_custom_call.1} parent=43 // pred_region
          %s326 = sand.u32 %s76, 1
          %s327 = scalar_lea.sflag [#allocation5], %s326
          %s328 = sand.u32 %s76, 1
          %s329 = smul.addr %s328, 8
          %s330 = scalar_lea.vmem [#allocation8], %s329
          %332 = dma.done %s327, 128
        $region48: #{tpu_custom_call.1} parent=43 // pred_fallthru
          _
      $region44: #{tpu_custom_call.1} parent=5 // pred_fallthru
        _
    $region6: #{tpu_custom_call.1} parent=1 // loop_footer
      %s19 = sadd.s32 1, %s15
    $region7: #{tpu_custom_call.1} parent=1 // loop_footer_branch
      %14 = sbr.rel target = $region3
    $region8: #{tpu_custom_call.1} parent=1 // loop_exit
      _
    %333 = vsyncpa [#allocation4], 1
    %s334 = scalar_lea.sflag [#allocation4], 1
    %335 = vsyncpa %s334, 1
    %336 = vsyncpa [#allocation7], 1
    %337 = vsyncpa [#allocation5], 1
    %s338 = scalar_lea.sflag [#allocation5], 1
    %339 = vsyncpa %s338, 1

</llo_original>
